<compile_context>
chip_gen: v5e
topology: v5e:2x2
jax: 0.10.0
libtpu: 0.0.40
codegen_flags: <defaults>
</compile_context>

<pallas_src>
import functools

import jax
import jax.numpy as jnp
import numpy as np
from jax.experimental import pallas as pl
from jax.experimental.pallas import tpu as pltpu


# ----------------------------- Pallas kernel --------------------------------

def ddpm_kernel(xn_ref, scales_ref, cond_ref, w1_ref, w2_ref, b2_ref,
                loss_ref, *, C):
    # xn_ref:     (2C, B*HW) packed [x0 ; noise] -> one dense sublane tile
    # scales_ref: (2,  B*HW) packed [a ; om] per-batch coefficients, lane-broadcast
    x0 = xn_ref[0:C, :]                     # (C, B*HW)
    nz = xn_ref[C:2 * C, :]                 # (C, B*HW)
    a = scales_ref[0:1, :]                  # (1, B*HW)
    om = scales_ref[1:2, :]                 # (1, B*HW)

    # forward diffusion (extract() gather already done in wrapper)
    x_t = a * x0 + om * nz                  # (C, B*HW)

    # synthetic noise-prediction model: 1x1 conv -> ReLU -> 1x1 conv, with the
    # time+label conditioning already folded into cond_ref (HD, B*HW).
    h = jnp.dot(w1_ref[...], x_t, preferred_element_type=jnp.float32) + cond_ref[...]
    h = jnp.maximum(h, 0.0)
    pred = jnp.dot(w2_ref[...], h, preferred_element_type=jnp.float32) + b2_ref[...]

    # F.mse_loss(pred, noise, reduction='none')
    diff = pred - nz
    loss_ref[...] = diff * diff


# ------------------------------ JAX wrapper ----------------------------------

@jax.jit
def trainer_ddpm_forward(x0, noise, t, temb, lemb, sqrt_ab, sqrt_1mab, params):
    B, C, H, W = x0.shape
    HW = H * W
    BHW = B * HW
    HD = temb.shape[1]

    # (B,C,H,W) -> (C, B*HW): fuse batch onto the 128-lane axis (HW=256 is a
    # clean multiple of 128, so per-batch boundaries stay lane-aligned).
    x0f = x0.reshape(B, C, HW).transpose(1, 0, 2).reshape(C, BHW)
    nzf = noise.reshape(B, C, HW).transpose(1, 0, 2).reshape(C, BHW)
    xn = jnp.concatenate([x0f, nzf], axis=0)                       # (2C, B*HW)

    # extract(): schedule gather here; broadcast per-batch scalars to the lanes
    # and pack both coefficient rows into one dense (2, B*HW) input.
    a_row = jnp.repeat(sqrt_ab[t], HW)                             # (B*HW,)
    om_row = jnp.repeat(sqrt_1mab[t], HW)                          # (B*HW,)
    scales = jnp.stack([a_row, om_row], axis=0)                    # (2, B*HW)

    # fold conditioning: b1 + temb + lemb, broadcast over each batch's lanes.
    cond_hb = params["b1"] + temb.T + lemb.T                       # (HD, B)
    cond = jnp.broadcast_to(cond_hb[:, :, None], (HD, B, HW)).reshape(HD, BHW)

    # NOTE: on v6e/v7x at larger H/W/HD, cast xn / w1 / w2 to bf16 here (keep
    # preferred_element_type=f32); on v5e keep f32 (no bf16 VPU).
    loss_flat = pl.pallas_call(
        functools.partial(ddpm_kernel, C=C),
        out_shape=jax.ShapeDtypeStruct((C, BHW), jnp.float32),
        in_specs=[pl.BlockSpec(memory_space=pltpu.MemorySpace.VMEM)] * 6,
        out_specs=pl.BlockSpec(memory_space=pltpu.MemorySpace.VMEM),
    )(xn, scales, cond, params["w1"], params["w2"], params["b2"])

    # (C, B*HW) -> (B, C, H, W)
    return loss_flat.reshape(C, B, HW).transpose(1, 0, 2).reshape(B, C, H, W)


# --------------------------- param / schedule setup --------------------------

def make_ddpm_schedule(beta_1, beta_T, T):
    # PyTorch computes these in float64 then extract() casts to float32;
    # we compute in float32 directly (covered by test tolerance).
    betas = jnp.linspace(beta_1, beta_T, T, dtype=jnp.float32)
    alphas = 1.0 - betas
    alphas_bar = jnp.cumprod(alphas)
    return jnp.sqrt(alphas_bar), jnp.sqrt(1.0 - alphas_bar)


def timestep_embedding(t, dim):
    half = dim // 2
    freqs = jnp.exp(-jnp.log(10000.0) * jnp.arange(half, dtype=jnp.float32) / half)
    args = t.astype(jnp.float32)[:, None] * freqs[None, :]
    return jnp.concatenate([jnp.sin(args), jnp.cos(args)], axis=-1)   # (B, dim)


def make_params(key, C, HD, num_classes):
    k1, k2, k3 = jax.random.split(key, 3)
    return {
        "w1": jax.random.normal(k1, (HD, C), jnp.float32) * 0.1,
        "b1": jnp.zeros((HD, 1), jnp.float32),
        "w2": jax.random.normal(k2, (C, HD), jnp.float32) * 0.1,
        "b2": jnp.zeros((C, 1), jnp.float32),
        "label_emb": jax.random.normal(k3, (num_classes, HD), jnp.float32) * 0.1,
    }


# pure-JAX reference for correctness check
def reference_forward(x0, noise, t, temb, lemb, sqrt_ab, sqrt_1mab, params):
    B, C, H, W = x0.shape
    a = sqrt_ab[t].reshape(B, 1, 1, 1)
    om = sqrt_1mab[t].reshape(B, 1, 1, 1)
    x_t = a * x0 + om * noise
    xf = x_t.reshape(B, C, H * W)
    cond = params["b1"][None] + temb[:, :, None] + lemb[:, :, None]         # (B,HD,1)
    h = jnp.einsum("hc,bcs->bhs", params["w1"], xf) + cond
    h = jnp.maximum(h, 0.0)
    pred = jnp.einsum("ch,bhs->bcs", params["w2"], h) + params["b2"][None]
    pred = pred.reshape(B, C, H, W)
    return (pred - noise) ** 2


if __name__ == "__main__":
    B, C, H, W = 2, 4, 16, 16
    HD = 32              # hidden width of synthetic noise-prediction model
    T = 100
    num_classes = 10
    beta_1, beta_T = 1e-4, 0.02

    key = jax.random.PRNGKey(0)
    k_x, k_t, k_n, k_l, k_p = jax.random.split(key, 5)

    x0 = jax.random.normal(k_x, (B, C, H, W), jnp.float32)
    labels = jax.random.randint(k_l, (B,), 0, num_classes, jnp.int32)
    # TODO(synk): torch.randint / torch.randn_like inside forward() have no
    # in-kernel equivalent with matching RNG; the (t, noise) randomness is
    # sampled deterministically in the driver instead.
    t = jax.random.randint(k_t, (B,), 0, T, jnp.int32)
    noise = jax.random.normal(k_n, (B, C, H, W), jnp.float32)

    sqrt_ab, sqrt_1mab = make_ddpm_schedule(beta_1, beta_T, T)
    params = make_params(k_p, C, HD, num_classes)

    temb = timestep_embedding(t, HD)              # (B, HD)
    lemb = params["label_emb"][labels]            # (B, HD)

    loss = trainer_ddpm_forward(x0, noise, t, temb, lemb,
                                sqrt_ab, sqrt_1mab, params)
    loss = jax.block_until_ready(loss)

    ref = reference_forward(x0, noise, t, temb, lemb, sqrt_ab, sqrt_1mab, params)
    assert loss.shape == (B, C, H, W)
    np.testing.assert_allclose(np.asarray(loss), np.asarray(ref),
                               rtol=1e-3, atol=1e-3)
    print("KERNEL_OK")
</pallas_src>

<mosaic_0001>
module attributes {stable_mosaic.version = 11 : i64} {
  func.func @ddpm_kernel(%arg0: memref<8x512xf32, #tpu.memory_space<vmem>>, %arg1: memref<2x512xf32, #tpu.memory_space<vmem>>, %arg2: memref<32x512xf32, #tpu.memory_space<vmem>>, %arg3: memref<32x4xf32, #tpu.memory_space<vmem>>, %arg4: memref<4x32xf32, #tpu.memory_space<vmem>>, %arg5: memref<4x1xf32, #tpu.memory_space<vmem>>, %arg6: memref<4x512xf32, #tpu.memory_space<vmem>>) attributes {dimension_semantics = [], scalar_prefetch = 0 : i64, scratch_operands = 0 : i64, tpu.core_type = #tpu.core_type<tc>} {
    %c0 = arith.constant 0 : index
    %c0_0 = arith.constant 0 : index
    %0 = vector.load %arg0[%c0, %c0_0] : memref<8x512xf32, #tpu.memory_space<vmem>>, vector<4x512xf32>
    %c4 = arith.constant 4 : index
    %c0_1 = arith.constant 0 : index
    %1 = vector.load %arg0[%c4, %c0_1] : memref<8x512xf32, #tpu.memory_space<vmem>>, vector<4x512xf32>
    %c0_2 = arith.constant 0 : index
    %c0_3 = arith.constant 0 : index
    %2 = vector.load %arg1[%c0_2, %c0_3] : memref<2x512xf32, #tpu.memory_space<vmem>>, vector<1x512xf32>
    %c1 = arith.constant 1 : index
    %c0_4 = arith.constant 0 : index
    %3 = vector.load %arg1[%c1, %c0_4] : memref<2x512xf32, #tpu.memory_space<vmem>>, vector<1x512xf32>
    %4 = vector.broadcast %2 : vector<1x512xf32> to vector<4x512xf32>
    %5 = arith.mulf %4, %0 : vector<4x512xf32>
    %6 = vector.broadcast %3 : vector<1x512xf32> to vector<4x512xf32>
    %7 = arith.mulf %6, %1 : vector<4x512xf32>
    %8 = arith.addf %5, %7 : vector<4x512xf32>
    %c0_5 = arith.constant 0 : index
    %c0_6 = arith.constant 0 : index
    %9 = vector.load %arg3[%c0_5, %c0_6] : memref<32x4xf32, #tpu.memory_space<vmem>>, vector<32x4xf32>
    %cst = arith.constant dense<0.000000e+00> : vector<32x512xf32>
    %10 = tpu.matmul %9, %8, %cst {dimension_numbers = #tpu.dot_dimension_numbers<[1], [0], [0], [1], [0, 0, 1, 1], [], []>} : vector<32x4xf32>, vector<4x512xf32>, vector<32x512xf32> -> vector<32x512xf32>
    %c0_7 = arith.constant 0 : index
    %c0_8 = arith.constant 0 : index
    %11 = vector.load %arg2[%c0_7, %c0_8] : memref<32x512xf32, #tpu.memory_space<vmem>>, vector<32x512xf32>
    %12 = arith.addf %10, %11 : vector<32x512xf32>
    %cst_9 = arith.constant 0.000000e+00 : f32
    %13 = vector.broadcast %cst_9 : f32 to vector<32x512xf32>
    %14 = arith.maximumf %12, %13 : vector<32x512xf32>
    %c0_10 = arith.constant 0 : index
    %c0_11 = arith.constant 0 : index
    %15 = vector.load %arg4[%c0_10, %c0_11] : memref<4x32xf32, #tpu.memory_space<vmem>>, vector<4x32xf32>
    %cst_12 = arith.constant dense<0.000000e+00> : vector<4x512xf32>
    %16 = tpu.matmul %15, %14, %cst_12 {dimension_numbers = #tpu.dot_dimension_numbers<[1], [0], [0], [1], [0, 0, 1, 1], [], []>} : vector<4x32xf32>, vector<32x512xf32>, vector<4x512xf32> -> vector<4x512xf32>
    %c0_13 = arith.constant 0 : index
    %c0_14 = arith.constant 0 : index
    %17 = vector.load %arg5[%c0_13, %c0_14] : memref<4x1xf32, #tpu.memory_space<vmem>>, vector<4x1xf32>
    %18 = vector.broadcast %17 : vector<4x1xf32> to vector<4x512xf32>
    %19 = arith.addf %16, %18 : vector<4x512xf32>
    %20 = arith.subf %19, %1 : vector<4x512xf32>
    %21 = arith.mulf %20, %20 : vector<4x512xf32>
    %c0_15 = arith.constant 0 : index
    %c0_16 = arith.constant 0 : index
    %22 = vector.load %arg6[%c0_15, %c0_16] : memref<4x512xf32, #tpu.memory_space<vmem>>, vector<4x512xf32>
    tpu.vector_store %arg6[%c0_15, %c0_16], %21 {strides = array<i32>} : memref<4x512xf32, #tpu.memory_space<vmem>>, vector<4x512xf32>,
    return
  }
}

</mosaic_0001>

<llo_original>
// kernel: trainer_ddpm_forward.1
$region0: #{trainer_ddpm_forward.1}
  #allocation0 [shape = 'u32[]', space=smem, size = 0x4, offset = 0x4, fixed_abs, tag = 'smem constant byte address 0x4 - core index']
  #allocation1 [shape = 'u32[72,128]{1,0:T(1,128)}', space=vmem, size = 0x9000, scoped, tag = 'internal scratch']
  %s0 = inlined_call_operand.vmem [shape: f32[8,512], index: 0, kind: input, shape index: {}]
  %s1 = inlined_call_operand.vmem [shape: f32[2,512], index: 1, kind: input, shape index: {}]
  %s2 = inlined_call_operand.vmem [shape: f32[32,512], index: 2, kind: input, shape index: {}]
  %s3 = inlined_call_operand.vmem [shape: f32[32,4], index: 3, kind: input, shape index: {}]
  %s4 = inlined_call_operand.vmem [shape: f32[4,32], index: 4, kind: input, shape index: {}]
  %s5 = inlined_call_operand.vmem [shape: f32[4,1], index: 5, kind: input, shape index: {}]
  %s6 = inlined_call_operand.vmem [shape: f32[4,512], index: 6, kind: output, shape index: {}]
  %s7 = sld [smem:[#allocation0]]
  $region34: #{trainer_ddpm_forward.1} parent=0
    _
  %s9 = ssub.s32 1, %s7
  %s10 = scalar_select 0, %s9, %s7
  // Predicated region
  $region2: #{trainer_ddpm_forward.1} parent=0 // pred_check
    _
  $region3: #{trainer_ddpm_forward.1} parent=0 // pred_check_branch
    %12 = sbr.rel (0) target = $region5
  $region4: #{trainer_ddpm_forward.1} parent=0 // pred_region
    _
  $region5: #{trainer_ddpm_forward.1} parent=0 // pred_fallthru
    _
  // Predicated region
  $region6: #{trainer_ddpm_forward.1} parent=0 // pred_check
    _
  $region7: #{trainer_ddpm_forward.1} parent=0 // pred_check_branch
    %14 = sbr.rel (0) target = $region9
  $region8: #{trainer_ddpm_forward.1} parent=0 // pred_region
    _
  $region9: #{trainer_ddpm_forward.1} parent=0 // pred_fallthru
    _
  // Predicated region
  $region10: #{trainer_ddpm_forward.1} parent=0 // pred_check
    _
  $region11: #{trainer_ddpm_forward.1} parent=0 // pred_check_branch
    %16 = sbr.rel (0) target = $region13
  $region12: #{trainer_ddpm_forward.1} parent=0 // pred_region
    _
  $region13: #{trainer_ddpm_forward.1} parent=0 // pred_fallthru
    _
  // Predicated region
  $region14: #{trainer_ddpm_forward.1} parent=0 // pred_check
    _
  $region15: #{trainer_ddpm_forward.1} parent=0 // pred_check_branch
    %18 = sbr.rel (0) target = $region17
  $region16: #{trainer_ddpm_forward.1} parent=0 // pred_region
    _
  $region17: #{trainer_ddpm_forward.1} parent=0 // pred_fallthru
    _
  // Predicated region
  $region18: #{trainer_ddpm_forward.1} parent=0 // pred_check
    _
  $region19: #{trainer_ddpm_forward.1} parent=0 // pred_check_branch
    %20 = sbr.rel (0) target = $region21
  $region20: #{trainer_ddpm_forward.1} parent=0 // pred_region
    _
  $region21: #{trainer_ddpm_forward.1} parent=0 // pred_fallthru
    _
  // Predicated region
  $region22: #{trainer_ddpm_forward.1} parent=0 // pred_check
    _
  $region23: #{trainer_ddpm_forward.1} parent=0 // pred_check_branch
    %22 = sbr.rel (0) target = $region25
  $region24: #{trainer_ddpm_forward.1} parent=0 // pred_region
    _
  $region25: #{trainer_ddpm_forward.1} parent=0 // pred_fallthru
    _
  %v23 = vld [vmem:[%s0] sm:$0xf]
  %v24 = vld [vmem:[%s0 + $0x8] sm:$0xf]
  %v25 = vld [vmem:[%s0 + $0x10] sm:$0xf]
  %v26 = vld [vmem:[%s0 + $0x18] sm:$0xf]
  %v27 = vld [vmem:[%s0] sm:$0xf0]
  %v28 = vld [vmem:[%s0 + $0x8] sm:$0xf0]
  %v29 = vld [vmem:[%s0 + $0x10] sm:$0xf0]
  %v30 = vld [vmem:[%s0 + $0x18] sm:$0xf0]
  %v31 = vld [vmem:[%s1] ss:$2 sm:$0xf]
  %s32 = scalar_lea.vmem %s1, 1
  %v33 = vld [vmem:[%s32] ss:$2 sm:$0xf]
  %v35 = vperm.slane %v31, 0
  %v36 = vperm.slane %v31, 1
  %v37 = vperm.slane %v31, 2
  %v38 = vperm.slane %v31, 3
  %v43 = vmul.f32 %v35, %v23
  %v44 = vmul.f32 %v36, %v24
  %v45 = vmul.f32 %v37, %v25
  %v46 = vmul.f32 %v38, %v26
  %v48 = vperm.slane %v33, 0
  %v49 = vperm.slane %v33, 1
  %v50 = vperm.slane %v33, 2
  %v51 = vperm.slane %v33, 3
  %v56 = vmul.f32 %v48, %v27
  %v57 = vmul.f32 %v49, %v28
  %v58 = vmul.f32 %v50, %v29
  %v59 = vmul.f32 %v51, %v30
  %v64 = vrot.slane %v56, 4
  %v65 = vrot.slane %v57, 4
  %v66 = vrot.slane %v58, 4
  %v67 = vrot.slane %v59, 4
  %v72 = vadd.f32 %v43, %v64
  %v73 = vadd.f32 %v44, %v65
  %v74 = vadd.f32 %v45, %v66
  %v75 = vadd.f32 %v46, %v67
  %v76 = vld [vmem:[%s3] sm:$0xff]
  %v77 = vld [vmem:[%s3 + $0x8] sm:$0xff]
  %v78 = vld [vmem:[%s3 + $0x10] sm:$0xff]
  %v79 = vld [vmem:[%s3 + $0x18] sm:$0xff]
  %v80 = vld [vmem:[%s2] sm:$0xff]
  %v81 = vld [vmem:[%s2 + $0x8] sm:$0xff]
  %v82 = vld [vmem:[%s2 + $0x10] sm:$0xff]
  %v83 = vld [vmem:[%s2 + $0x18] sm:$0xff]
  %v84 = vld [vmem:[%s2 + $0x20] sm:$0xff]
  %v85 = vld [vmem:[%s2 + $0x28] sm:$0xff]
  %v86 = vld [vmem:[%s2 + $0x30] sm:$0xff]
  %v87 = vld [vmem:[%s2 + $0x38] sm:$0xff]
  %v88 = vld [vmem:[%s2 + $0x40] sm:$0xff]
  %v89 = vld [vmem:[%s2 + $0x48] sm:$0xff]
  %v90 = vld [vmem:[%s2 + $0x50] sm:$0xff]
  %v91 = vld [vmem:[%s2 + $0x58] sm:$0xff]
  %v92 = vld [vmem:[%s2 + $0x60] sm:$0xff]
  %v93 = vld [vmem:[%s2 + $0x68] sm:$0xff]
  %v94 = vld [vmem:[%s2 + $0x70] sm:$0xff]
  %v95 = vld [vmem:[%s2 + $0x78] sm:$0xff]
  %vm96 = vcmask 31744
  %v98 = vsel %vm96, %v76, 0
  %v101 = vsel %vm96, %v77, 0
  %v104 = vsel %vm96, %v78, 0
  %v107 = vsel %vm96, %v79, 0
  %vm109 = vcmask 1043456
  %v111 = vsel %vm109, %v72, 0
  %v114 = vsel %vm109, %v73, 0
  %v117 = vsel %vm109, %v74, 0
  %v120 = vsel %vm109, %v75, 0
  %122 = vmatpush.msra.mxu0 0.0
  %123 = vmatpush.msra.mxu0 0.0
  %124 = vmatpush.msra.mxu0 0.0
  %125 = vmatpush.msra.mxu0 0.0
  %126 = vmatpush.msra.mxu0 0.0
  %127 = vmatpush.msra.mxu0 0.0
  %128 = vmatpush.msra.mxu0 0.0
  %129 = vmatpush.msra.mxu0 0.0
  %130 = vmatpush.msra.mxu0 0.0
  %131 = vmatpush.msra.mxu0 0.0
  %132 = vmatpush.msra.mxu0 0.0
  %133 = vmatpush.msra.mxu0 0.0
  %134 = vmatpush.msra.mxu0 0.0
  %135 = vmatpush.msra.mxu0 0.0
  %136 = vmatpush.msra.mxu0 0.0
  %137 = vmatpush.msra.mxu0 %v111
  %138 = vmatmul.f32.gmra.mxu0 %v98
  %v139 = vpop.f32.mrf.mxu0
  %v140 = vadd.f32 %v80, %v139
  %141 = vmatmul.f32.gmra.mxu0 %v101
  %v142 = vpop.f32.mrf.mxu0
  %v143 = vadd.f32 %v84, %v142
  %144 = vmatmul.f32.gmra.mxu0 %v104
  %v145 = vpop.f32.mrf.mxu0
  %v146 = vadd.f32 %v88, %v145
  %147 = vmatmul.f32.gmra.mxu0 %v107
  %v148 = vpop.f32.mrf.mxu0
  %v149 = vadd.f32 %v92, %v148
  %150 = vdwg.mxu0
  %151 = vmatpush.msra.mxu0 0.0
  %152 = vmatpush.msra.mxu0 0.0
  %153 = vmatpush.msra.mxu0 0.0
  %154 = vmatpush.msra.mxu0 0.0
  %155 = vmatpush.msra.mxu0 0.0
  %156 = vmatpush.msra.mxu0 0.0
  %157 = vmatpush.msra.mxu0 0.0
  %158 = vmatpush.msra.mxu0 0.0
  %159 = vmatpush.msra.mxu0 0.0
  %160 = vmatpush.msra.mxu0 0.0
  %161 = vmatpush.msra.mxu0 0.0
  %162 = vmatpush.msra.mxu0 0.0
  %163 = vmatpush.msra.mxu0 0.0
  %164 = vmatpush.msra.mxu0 0.0
  %165 = vmatpush.msra.mxu0 0.0
  %166 = vmatpush.msra.mxu0 %v114
  %167 = vmatmul.f32.gmra.mxu0 %v98
  %v168 = vpop.f32.mrf.mxu0
  %v169 = vadd.f32 %v81, %v168
  %170 = vmatmul.f32.gmra.mxu0 %v101
  %v171 = vpop.f32.mrf.mxu0
  %v172 = vadd.f32 %v85, %v171
  %173 = vmatmul.f32.gmra.mxu0 %v104
  %v174 = vpop.f32.mrf.mxu0
  %v175 = vadd.f32 %v89, %v174
  %176 = vmatmul.f32.gmra.mxu0 %v107
  %v177 = vpop.f32.mrf.mxu0
  %v178 = vadd.f32 %v93, %v177
  %179 = vdwg.mxu0
  %180 = vmatpush.msra.mxu0 0.0
  %181 = vmatpush.msra.mxu0 0.0
  %182 = vmatpush.msra.mxu0 0.0
  %183 = vmatpush.msra.mxu0 0.0
  %184 = vmatpush.msra.mxu0 0.0
  %185 = vmatpush.msra.mxu0 0.0
  %186 = vmatpush.msra.mxu0 0.0
  %187 = vmatpush.msra.mxu0 0.0
  %188 = vmatpush.msra.mxu0 0.0
  %189 = vmatpush.msra.mxu0 0.0
  %190 = vmatpush.msra.mxu0 0.0
  %191 = vmatpush.msra.mxu0 0.0
  %192 = vmatpush.msra.mxu0 0.0
  %193 = vmatpush.msra.mxu0 0.0
  %194 = vmatpush.msra.mxu0 0.0
  %195 = vmatpush.msra.mxu0 %v117
  %196 = vmatmul.f32.gmra.mxu0 %v98
  %v197 = vpop.f32.mrf.mxu0
  %v198 = vadd.f32 %v82, %v197
  %199 = vmatmul.f32.gmra.mxu0 %v101
  %v200 = vpop.f32.mrf.mxu0
  %v201 = vadd.f32 %v86, %v200
  %202 = vmatmul.f32.gmra.mxu0 %v104
  %v203 = vpop.f32.mrf.mxu0
  %v204 = vadd.f32 %v90, %v203
  %205 = vmatmul.f32.gmra.mxu0 %v107
  %v206 = vpop.f32.mrf.mxu0
  %v207 = vadd.f32 %v94, %v206
  %208 = vdwg.mxu0
  %209 = vmatpush.msra.mxu0 0.0
  %210 = vmatpush.msra.mxu0 0.0
  %211 = vmatpush.msra.mxu0 0.0
  %212 = vmatpush.msra.mxu0 0.0
  %213 = vmatpush.msra.mxu0 0.0
  %214 = vmatpush.msra.mxu0 0.0
  %215 = vmatpush.msra.mxu0 0.0
  %216 = vmatpush.msra.mxu0 0.0
  %217 = vmatpush.msra.mxu0 0.0
  %218 = vmatpush.msra.mxu0 0.0
  %219 = vmatpush.msra.mxu0 0.0
  %220 = vmatpush.msra.mxu0 0.0
  %221 = vmatpush.msra.mxu0 0.0
  %222 = vmatpush.msra.mxu0 0.0
  %223 = vmatpush.msra.mxu0 0.0
  %224 = vmatpush.msra.mxu0 %v120
  %225 = vmatmul.f32.gmra.mxu0 %v98
  %v226 = vpop.f32.mrf.mxu0
  %v227 = vadd.f32 %v83, %v226
  %228 = vmatmul.f32.gmra.mxu0 %v101
  %v229 = vpop.f32.mrf.mxu0
  %v230 = vadd.f32 %v87, %v229
  %231 = vmatmul.f32.gmra.mxu0 %v104
  %v232 = vpop.f32.mrf.mxu0
  %v233 = vadd.f32 %v91, %v232
  %234 = vmatmul.f32.gmra.mxu0 %v107
  %v235 = vpop.f32.mrf.mxu0
  %v236 = vadd.f32 %v95, %v235
  %237 = vdwg.mxu0
  %v238 = vmax.f32 %v140, 0.0
  %v239 = vmax.f32 %v169, 0.0
  %v240 = vmax.f32 %v198, 0.0
  %v241 = vmax.f32 %v227, 0.0
  %v242 = vmax.f32 %v143, 0.0
  %v243 = vmax.f32 %v172, 0.0
  %v244 = vmax.f32 %v201, 0.0
  %v245 = vmax.f32 %v230, 0.0
  %v246 = vmax.f32 %v146, 0.0
  %v247 = vmax.f32 %v175, 0.0
  %v248 = vmax.f32 %v204, 0.0
  %v249 = vmax.f32 %v233, 0.0
  %v250 = vmax.f32 %v149, 0.0
  %v251 = vmax.f32 %v178, 0.0
  %v252 = vmax.f32 %v207, 0.0
  %v253 = vmax.f32 %v236, 0.0
  %v254 = vld [vmem:[%s4] sm:$0xf]
  %v255 = vld [vmem:[%s5] sm:$0xf]
  %257 = vset.pattern.permute.xlu0 0
  %258 = vperm.xlu0 %257, %v255
  %v259 = vpop.permute.xlu0 %258
  %vm261 = vcmask 261120
  %v263 = vsel %vm261, %v254, 0
  %265 = vmatpush.msra.mxu0 0.0
  %266 = vmatpush.msra.mxu0 0.0
  %267 = vmatpush.msra.mxu0 0.0
  %268 = vmatpush.msra.mxu0 0.0
  %269 = vmatpush.msra.mxu0 0.0
  %270 = vmatpush.msra.mxu0 0.0
  %271 = vmatpush.msra.mxu0 0.0
  %272 = vmatpush.msra.mxu0 0.0
  %273 = vmatpush.msra.mxu0 0.0
  %274 = vmatpush.msra.mxu0 0.0
  %275 = vmatpush.msra.mxu0 0.0
  %276 = vmatpush.msra.mxu0 0.0
  %277 = vmatpush.msra.mxu0 %v250
  %278 = vmatpush.msra.mxu0 %v246
  %279 = vmatpush.msra.mxu0 %v242
  %280 = vmatpush.msra.mxu0 %v238
  %281 = vmatmul.f32.gmra.mxu0 %v263
  %v282 = vpop.f32.mrf.mxu0
  %v283 = vadd.f32 %v259, %v282
  %284 = vdwg.mxu0
  %285 = vmatpush.msra.mxu0 0.0
  %286 = vmatpush.msra.mxu0 0.0
  %287 = vmatpush.msra.mxu0 0.0
  %288 = vmatpush.msra.mxu0 0.0
  %289 = vmatpush.msra.mxu0 0.0
  %290 = vmatpush.msra.mxu0 0.0
  %291 = vmatpush.msra.mxu0 0.0
  %292 = vmatpush.msra.mxu0 0.0
  %293 = vmatpush.msra.mxu0 0.0
  %294 = vmatpush.msra.mxu0 0.0
  %295 = vmatpush.msra.mxu0 0.0
  %296 = vmatpush.msra.mxu0 0.0
  %297 = vmatpush.msra.mxu0 %v251
  %298 = vmatpush.msra.mxu0 %v247
  %299 = vmatpush.msra.mxu0 %v243
  %300 = vmatpush.msra.mxu0 %v239
  %301 = vmatmul.f32.gmra.mxu0 %v263
  %v302 = vpop.f32.mrf.mxu0
  %v303 = vadd.f32 %v259, %v302
  %304 = vdwg.mxu0
  %305 = vmatpush.msra.mxu0 0.0
  %306 = vmatpush.msra.mxu0 0.0
  %307 = vmatpush.msra.mxu0 0.0
  %308 = vmatpush.msra.mxu0 0.0
  %309 = vmatpush.msra.mxu0 0.0
  %310 = vmatpush.msra.mxu0 0.0
  %311 = vmatpush.msra.mxu0 0.0
  %312 = vmatpush.msra.mxu0 0.0
  %313 = vmatpush.msra.mxu0 0.0
  %314 = vmatpush.msra.mxu0 0.0
  %315 = vmatpush.msra.mxu0 0.0
  %316 = vmatpush.msra.mxu0 0.0
  %317 = vmatpush.msra.mxu0 %v252
  %318 = vmatpush.msra.mxu0 %v248
  %319 = vmatpush.msra.mxu0 %v244
  %320 = vmatpush.msra.mxu0 %v240
  %321 = vmatmul.f32.gmra.mxu0 %v263
  %v322 = vpop.f32.mrf.mxu0
  %v323 = vadd.f32 %v259, %v322
  %324 = vdwg.mxu0
  %325 = vmatpush.msra.mxu0 0.0
  %326 = vmatpush.msra.mxu0 0.0
  %327 = vmatpush.msra.mxu0 0.0
  %328 = vmatpush.msra.mxu0 0.0
  %329 = vmatpush.msra.mxu0 0.0
  %330 = vmatpush.msra.mxu0 0.0
  %331 = vmatpush.msra.mxu0 0.0
  %332 = vmatpush.msra.mxu0 0.0
  %333 = vmatpush.msra.mxu0 0.0
  %334 = vmatpush.msra.mxu0 0.0
  %335 = vmatpush.msra.mxu0 0.0
  %336 = vmatpush.msra.mxu0 0.0
  %337 = vmatpush.msra.mxu0 %v253
  %338 = vmatpush.msra.mxu0 %v249
  %339 = vmatpush.msra.mxu0 %v245
  %340 = vmatpush.msra.mxu0 %v241
  %341 = vmatmul.f32.gmra.mxu0 %v263
  %v342 = vpop.f32.mrf.mxu0
  %v343 = vadd.f32 %v259, %v342
  %344 = vdwg.mxu0
  %v349 = vrot.slane %v27, 4
  %v350 = vrot.slane %v28, 4
  %v351 = vrot.slane %v29, 4
  %v352 = vrot.slane %v30, 4
  %v357 = vsub.f32 %v283, %v349
  %v358 = vsub.f32 %v303, %v350
  %v359 = vsub.f32 %v323, %v351
  %v360 = vsub.f32 %v343, %v352
  %v361 = vmul.f32 %v357, %v357
  %v362 = vmul.f32 %v358, %v358
  %v363 = vmul.f32 %v359, %v359
  %v364 = vmul.f32 %v360, %v360
  %v369 = vrot.slane %v362, 4
  %v370 = vrot.slane %v364, 4
  %v371 = vsel %vm109, %v361, %v369
  %v372 = vsel %vm109, %v363, %v370
  %375 = vst [vmem:[%s6] sm:$0xff] %v371
  %376 = vst [vmem:[%s6 + $0x8] sm:$0xff] %v372
  // Predicated region
  $region26: #{trainer_ddpm_forward.1} parent=0 // pred_check
    _
  $region27: #{trainer_ddpm_forward.1} parent=0 // pred_check_branch
    %378 = sbr.rel (0) target = $region29
  $region28: #{trainer_ddpm_forward.1} parent=0 // pred_region
    _
  $region29: #{trainer_ddpm_forward.1} parent=0 // pred_fallthru
    _
  // Predicated region
  $region30: #{trainer_ddpm_forward.1} parent=0 // pred_check
    _
  $region31: #{trainer_ddpm_forward.1} parent=0 // pred_check_branch
    %380 = sbr.rel (0) target = $region33
  $region32: #{trainer_ddpm_forward.1} parent=0 // pred_region
    _
  $region33: #{trainer_ddpm_forward.1} parent=0 // pred_fallthru
    _

</llo_original>
